<compile_context>
chip_gen: v6e
topology: v6e:2x2x1
jax: 0.10.0
libtpu: 0.0.40
codegen_flags: <defaults>
</compile_context>

<pallas_src>
import functools

import jax
import jax.numpy as jnp
from jax.experimental import pallas as pl
from jax.experimental.pallas import tpu as pltpu

SLAB = 128  # lane width of the packed activation slab / packed output


def _round_up(n, m):
    return ((n + m - 1) // m) * m


# ---------------------------------------------------------------------------
# Shared in-kernel math: one GRU-unit step on a packed (bb, 128) slab.
# slab lanes: [y_mean(L) | y_std(L) | x(D) | mk(1) | 1.0(1) | 0 padding]
# ---------------------------------------------------------------------------
def _gru_core(slab, w1g, w1n, w2g, w2n, b2g, b2n, *, L, D):
    f32 = jnp.float32

    # Fused [update | reset] layer 1; bias folded in via the constant-one lane.
    h1g = jnp.tanh(jnp.dot(slab, w1g, preferred_element_type=f32))      # (bb, 2*UP)

    # Fused gate layer 2. Output lanes: [0,2L) = reset (duplicated), [2L,3L) = update.
    gates = jax.nn.sigmoid(
        jnp.dot(h1g, w2g, preferred_element_type=f32) + b2g)            # (bb, 128)
    lane = jax.lax.broadcasted_iota(jnp.int32, gates.shape, 1)
    gate_mult = jnp.where(lane < 2 * L, gates, 1.0)                     # [r, r, 1, ...]
    update_gate = gates[:, 2 * L:3 * L]                                 # (bb, L)

    # New-state net on the reset-gated slab: single K=128 matmul per layer.
    gated = slab * gate_mult            # [y*r | y_std*r | x | mk | 1 | 0]
    h1n = jnp.tanh(jnp.dot(gated, w1n, preferred_element_type=f32))     # (bb, UP)
    ns = jnp.dot(h1n, w2n, preferred_element_type=f32) + b2n            # (bb, 2L)
    new_state = ns[:, :L]
    new_state_std = jnp.abs(ns[:, L:2 * L])

    ym = slab[:, :L]
    ys = slab[:, L:2 * L]
    mk = slab[:, 2 * L + D:2 * L + D + 1]                               # (bb, 1)

    omu = 1.0 - update_gate
    output_y = omu * new_state + update_gate * ym
    pre_std = omu * new_state_std + update_gate * ys
    nmk = 1.0 - mk
    new_y = mk * output_y + nmk * ym
    new_y_std = jnp.abs(mk * pre_std + nmk * ys)
    return output_y, new_y, new_y_std


def _pack_out(output_y, new_y, new_y_std):
    bb, L = output_y.shape
    pieces = [output_y, new_y, new_y_std]
    pad = SLAB - 3 * L
    if pad > 0:
        pieces.append(jnp.zeros((bb, pad), jnp.float32))
    return jnp.concatenate(pieces, axis=-1)


# ---------------------------------------------------------------------------
# Kernels
# ---------------------------------------------------------------------------
def _gru_step_kernel(slab_ref, w1_ref, w2g_ref, w2n_ref, b2_ref, out_ref,
                     *, L, D, UP):
    slab = slab_ref[...]
    output_y, new_y, new_y_std = _gru_core(
        slab,
        w1_ref[:, :2 * UP], w1_ref[:, 2 * UP:],
        w2g_ref[...], w2n_ref[...],
        b2_ref[:, :SLAB], b2_ref[:, SLAB:],
        L=L, D=D)
    out_ref[...] = _pack_out(output_y, new_y, new_y_std)


def _gru_seq_kernel(xin_ref, init_ref, w1_ref, w2g_ref, w2n_ref, b2_ref,
                    out_ref, state_ref, *, L, D, UP):
    t = pl.program_id(1)

    @pl.when(t == 0)
    def _():
        state_ref[...] = init_ref[...]

    # state lanes [0, 2L) hold (y, y_std); xin lanes [2L, ..) hold (x, mk, 1).
    slab = state_ref[...] + xin_ref[0]
    output_y, new_y, new_y_std = _gru_core(
        slab,
        w1_ref[:, :2 * UP], w1_ref[:, 2 * UP:],
        w2g_ref[...], w2n_ref[...],
        b2_ref[:, :SLAB], b2_ref[:, SLAB:],
        L=L, D=D)
    out_ref[0] = _pack_out(output_y, new_y, new_y_std)

    bb = new_y.shape[0]
    state_ref[...] = jnp.concatenate(
        [new_y, new_y_std, jnp.zeros((bb, SLAB - 2 * L), jnp.float32)], axis=-1)


# ---------------------------------------------------------------------------
# Weight packing (call ONCE; hoisted out of the per-step path)
# ---------------------------------------------------------------------------
def prepare_params(params, latent_dim, input_dim):
    L, D = latent_dim, input_dim
    IN = 2 * L + D
    assert IN + 2 <= SLAB, "2*latent_dim + input_dim + 2 must fit in 128 lanes"
    assert 3 * L <= SLAB, "3*latent_dim must fit in 128 lanes"
    U = params["ug_w1"].shape[-1]
    UP = _round_up(U, 128)
    ones_row = IN + 1                      # lane carrying the constant 1.0

    def layer1(w, b):                      # (IN, U), (1, U) -> (SLAB, UP)
        out = jnp.zeros((SLAB, UP), jnp.float32)
        out = out.at[:IN, :U].set(w)
        out = out.at[ones_row, :U].set(b[0])      # fold bias via the ones lane
        return out

    w1 = jnp.concatenate(
        [layer1(params["ug_w1"], params["ug_b1"]),
         layer1(params["rg_w1"], params["rg_b1"]),
         layer1(params["ns_w1"], params["ns_b1"])], axis=1)      # (128, 3*UP)

    # Fused gate layer 2: cols [0,L)+[L,2L) = reset (duplicated), [2L,3L) = update.
    w2g = jnp.zeros((2 * UP, SLAB), jnp.float32)
    w2g = w2g.at[UP:UP + U, 0:L].set(params["rg_w2"])
    w2g = w2g.at[UP:UP + U, L:2 * L].set(params["rg_w2"])
    w2g = w2g.at[0:U, 2 * L:3 * L].set(params["ug_w2"])
    b2g = jnp.zeros((1, SLAB), jnp.float32)
    b2g = b2g.at[:, 0:L].set(params["rg_b2"])
    b2g = b2g.at[:, L:2 * L].set(params["rg_b2"])
    b2g = b2g.at[:, 2 * L:3 * L].set(params["ug_b2"])

    w2n = jnp.zeros((UP, 2 * L), jnp.float32).at[:U, :].set(params["ns_w2"])
    b2 = jnp.concatenate([b2g, params["ns_b2"]], axis=1)         # (1, 128 + 2L)

    return {"w1": w1, "w2g": w2g, "w2n": w2n, "b2": b2,
            "UP": UP, "L": L, "D": D}


def _mask_flag(mask):
    # Assumes non-negative mask values (binary observation masks) — matches the
    # reference's (sum(mask) > 0) semantics.
    return (jnp.sum(mask, axis=-1, keepdims=True) > 0).astype(jnp.float32)


def _weight_list(prepped):
    return (prepped["w1"], prepped["w2g"], prepped["w2n"], prepped["b2"])


# ---------------------------------------------------------------------------
# Single-step forward (matches the PyTorch module's forward)
# ---------------------------------------------------------------------------
def gru_unit_forward(y_mean, y_std, x, mask, prepped, *, block_b=None):
    B, L = y_mean.shape
    D = x.shape[-1]
    assert L == prepped["L"] and D == prepped["D"]
    UP = prepped["UP"]

    if block_b is None:
        block_b = B          # one grid step; no per-core split at small batch
    assert B % block_b == 0

    mk = _mask_flag(mask)
    pad = SLAB - (2 * L + D + 2)
    slab = jnp.concatenate(
        [y_mean, y_std, x, mk, jnp.ones((B, 1), jnp.float32),
         jnp.zeros((B, pad), jnp.float32)], axis=-1)             # (B, 128)

    weights = _weight_list(prepped)
    kernel = functools.partial(_gru_step_kernel, L=L, D=D, UP=UP)

    out = pl.pallas_call(
        kernel,
        out_shape=jax.ShapeDtypeStruct((B, SLAB), jnp.float32),
        grid_spec=pltpu.PrefetchScalarGridSpec(
            num_scalar_prefetch=0,
            grid=(B // block_b,),
            in_specs=[pl.BlockSpec((block_b, SLAB), lambda i: (i, 0))]
                     + [pl.BlockSpec(w.shape, lambda i: (0, 0)) for w in weights],
            out_specs=pl.BlockSpec((block_b, SLAB), lambda i: (i, 0)),
        ),
        compiler_params=pltpu.CompilerParams(
            dimension_semantics=("parallel",)),
    )(slab, *weights)

    return out[:, :L], out[:, L:2 * L], out[:, 2 * L:3 * L]


# ---------------------------------------------------------------------------
# In-kernel time loop: apply the cell over T steps in ONE pallas_call.
# Weights are DMA'd once (constant index_map) and stay VMEM-resident; the
# recurrent (new_y, new_y_std) state is carried in VMEM scratch.
# ---------------------------------------------------------------------------
def gru_unit_sequence(y_mean0, y_std0, x_seq, mask_seq, prepped, *, block_b=None):
    T, B, D = x_seq.shape
    L = y_mean0.shape[-1]
    assert L == prepped["L"] and D == prepped["D"]
    UP = prepped["UP"]

    if block_b is None:
        block_b = B          # on v7x pass block_b=B//2 only when B is large
    assert B % block_b == 0

    mk = _mask_flag(mask_seq)                                    # (T, B, 1)
    pad = SLAB - (2 * L + D + 2)
    xin = jnp.concatenate(
        [jnp.zeros((T, B, 2 * L), jnp.float32), x_seq, mk,
         jnp.ones((T, B, 1), jnp.float32),
         jnp.zeros((T, B, pad), jnp.float32)], axis=-1)          # (T, B, 128)
    init = jnp.concatenate(
        [y_mean0, y_std0, jnp.zeros((B, SLAB - 2 * L), jnp.float32)], axis=-1)

    weights = _weight_list(prepped)
    kernel = functools.partial(_gru_seq_kernel, L=L, D=D, UP=UP)

    out = pl.pallas_call(
        kernel,
        out_shape=jax.ShapeDtypeStruct((T, B, SLAB), jnp.float32),
        grid_spec=pltpu.PrefetchScalarGridSpec(
            num_scalar_prefetch=0,
            grid=(B // block_b, T),
            in_specs=[pl.BlockSpec((1, block_b, SLAB), lambda b, t: (t, b, 0)),
                      pl.BlockSpec((block_b, SLAB), lambda b, t: (b, 0))]
                     + [pl.BlockSpec(w.shape, lambda b, t: (0, 0)) for w in weights],
            out_specs=pl.BlockSpec((1, block_b, SLAB), lambda b, t: (t, b, 0)),
            scratch_shapes=[pltpu.VMEM((block_b, SLAB), jnp.float32)],
        ),
        compiler_params=pltpu.CompilerParams(
            dimension_semantics=("parallel", "arbitrary")),
    )(xin, init, *weights)

    return out[..., :L], out[..., L:2 * L], out[..., 2 * L:3 * L]


# ---------------------------------------------------------------------------
# Pure-JAX references (mirror the PyTorch module) and param init
# ---------------------------------------------------------------------------
def _reference(y_mean, y_std, x, mask, p):
    def mlp(h, w1, b1, w2, b2):
        return jnp.tanh(h @ w1 + b1) @ w2 + b2

    yc = jnp.concatenate([y_mean, y_std, x], -1)
    u = jax.nn.sigmoid(mlp(yc, p["ug_w1"], p["ug_b1"], p["ug_w2"], p["ug_b2"]))
    r = jax.nn.sigmoid(mlp(yc, p["rg_w1"], p["rg_b1"], p["rg_w2"], p["rg_b2"]))
    cc = jnp.concatenate([y_mean * r, y_std * r, x], -1)
    ns = mlp(cc, p["ns_w1"], p["ns_b1"], p["ns_w2"], p["ns_b2"])
    L = y_mean.shape[-1]
    new_state, new_state_std = ns[:, :L], jnp.abs(ns[:, L:])
    output_y = (1 - u) * new_state + u * y_mean
    new_y_std = (1 - u) * new_state_std + u * y_std
    mk = (jnp.sum(mask, -1, keepdims=True) > 0).astype(jnp.float32)
    new_y = mk * output_y + (1 - mk) * y_mean
    new_y_std = jnp.abs(mk * new_y_std + (1 - mk) * y_std)
    return output_y, new_y, new_y_std


def _reference_sequence(y0, ystd0, x_seq, mask_seq, p):
    y, ystd = y0, ystd0
    outs = []
    for t in range(x_seq.shape[0]):
        oy, ny, nys = _reference(y, ystd, x_seq[t], mask_seq[t], p)
        outs.append((oy, ny, nys))
        y, ystd = ny, nys
    stack = lambda i: jnp.stack([o[i] for o in outs], axis=0)
    return stack(0), stack(1), stack(2)


def make_params(key, latent_dim, input_dim, n_units):
    """Deterministic N(0, 0.1) init (matches utils.init_network_weights style)."""
    in_dim = 2 * latent_dim + input_dim
    shapes = {
        "ug_w1": (in_dim, n_units), "ug_b1": (1, n_units),
        "ug_w2": (n_units, latent_dim), "ug_b2": (1, latent_dim),
        "rg_w1": (in_dim, n_units), "rg_b1": (1, n_units),
        "rg_w2": (n_units, latent_dim), "rg_b2": (1, latent_dim),
        "ns_w1": (in_dim, n_units), "ns_b1": (1, n_units),
        "ns_w2": (n_units, 2 * latent_dim), "ns_b2": (1, 2 * latent_dim),
    }
    params = {}
    for name, shape in sorted(shapes.items()):
        key, sub = jax.random.split(key)
        params[name] = 0.1 * jax.random.normal(sub, shape, dtype=jnp.float32)
    return params


if __name__ == "__main__":
    B, L, D, U, T = 16, 32, 16, 100, 8

    key = jax.random.PRNGKey(0)
    k1, k2, k3, k4, k5, k6, kp = jax.random.split(key, 7)

    y_mean = jax.random.normal(k1, (B, L), dtype=jnp.float32)
    y_std = jnp.abs(jax.random.normal(k2, (B, L), dtype=jnp.float32))
    x = jax.random.normal(k3, (B, D), dtype=jnp.float32)
    mask = (jax.random.uniform(k4, (B, D)) > 0.5).astype(jnp.float32)
    mask = mask.at[0].set(0.0)          # exercise the "no observation" branch

    params = make_params(kp, L, D, U)
    prepped = prepare_params(params, L, D)   # hoisted out of the call path

    # --- single-step cell (exact forward semantics of the PyTorch module) ----
    out = gru_unit_forward(y_mean, y_std, x, mask, prepped)
    out = jax.block_until_ready(out)
    ref = _reference(y_mean, y_std, x, mask, params)
    for got, want in zip(out, ref):
        assert jnp.allclose(got, want, atol=1e-4, rtol=1e-4), "single-step mismatch"

    # --- in-kernel time loop: T recurrent applications, weights VMEM-resident -
    x_seq = jax.random.normal(k5, (T, B, D), dtype=jnp.float32)
    mask_seq = (jax.random.uniform(k6, (T, B, D)) > 0.5).astype(jnp.float32)
    mask_seq = mask_seq.at[0, 0].set(0.0)

    seq_out = gru_unit_sequence(y_mean, y_std, x_seq, mask_seq, prepped)
    seq_out = jax.block_until_ready(seq_out)
    seq_ref = _reference_sequence(y_mean, y_std, x_seq, mask_seq, params)
    for got, want in zip(seq_out, seq_ref):
        assert jnp.allclose(got, want, atol=3e-4, rtol=3e-4), "sequence mismatch"

    print("KERNEL_OK")
</pallas_src>

<mosaic_0001>
module attributes {stable_mosaic.version = 11 : i64} {
  func.func @_gru_step_kernel(%arg0: i32, %arg1: memref<16x128xf32, #tpu.memory_space<vmem>>, %arg2: memref<128x384xf32, #tpu.memory_space<vmem>>, %arg3: memref<256x128xf32, #tpu.memory_space<vmem>>, %arg4: memref<128x64xf32, #tpu.memory_space<vmem>>, %arg5: memref<1x192xf32, #tpu.memory_space<vmem>>, %arg6: memref<16x128xf32, #tpu.memory_space<vmem>>) attributes {dimension_semantics = [#tpu.dimension_semantics<parallel>], iteration_bounds = array<i64: 1>, scalar_prefetch = 0 : i64, scratch_operands = 0 : i64, tpu.core_type = #tpu.core_type<tc>, window_params = [{transform_indices = @transform_0, window_bounds = array<i64: 16, 128>}, {pipeline_mode = #tpu.pipeline_mode<synchronous>, transform_indices = @transform_1, window_bounds = array<i64: 128, 384>}, {pipeline_mode = #tpu.pipeline_mode<synchronous>, transform_indices = @transform_2, window_bounds = array<i64: 256, 128>}, {pipeline_mode = #tpu.pipeline_mode<synchronous>, transform_indices = @transform_3, window_bounds = array<i64: 128, 64>}, {pipeline_mode = #tpu.pipeline_mode<synchronous>, transform_indices = @transform_4, window_bounds = array<i64: 1, 192>}, {transform_indices = @transform_5, window_bounds = array<i64: 16, 128>}]} {
    %c0 = arith.constant 0 : index
    %c0_0 = arith.constant 0 : index
    %0 = vector.load %arg1[%c0, %c0_0] : memref<16x128xf32, #tpu.memory_space<vmem>>, vector<16x128xf32>
    %c0_1 = arith.constant 0 : index
    %c0_2 = arith.constant 0 : index
    %1 = vector.load %arg2[%c0_1, %c0_2] : memref<128x384xf32, #tpu.memory_space<vmem>>, vector<128x256xf32>
    %c0_3 = arith.constant 0 : index
    %c256 = arith.constant 256 : index
    %2 = vector.load %arg2[%c0_3, %c256] : memref<128x384xf32, #tpu.memory_space<vmem>>, vector<128x128xf32>
    %c0_4 = arith.constant 0 : index
    %c0_5 = arith.constant 0 : index
    %3 = vector.load %arg3[%c0_4, %c0_5] : memref<256x128xf32, #tpu.memory_space<vmem>>, vector<256x128xf32>
    %c0_6 = arith.constant 0 : index
    %c0_7 = arith.constant 0 : index
    %4 = vector.load %arg4[%c0_6, %c0_7] : memref<128x64xf32, #tpu.memory_space<vmem>>, vector<128x64xf32>
    %c0_8 = arith.constant 0 : index
    %c0_9 = arith.constant 0 : index
    %5 = vector.load %arg5[%c0_8, %c0_9] : memref<1x192xf32, #tpu.memory_space<vmem>>, vector<1x128xf32>
    %c0_10 = arith.constant 0 : index
    %c128 = arith.constant 128 : index
    %6 = vector.load %arg5[%c0_10, %c128] : memref<1x192xf32, #tpu.memory_space<vmem>>, vector<1x64xf32>
    %cst = arith.constant dense<0.000000e+00> : vector<16x256xf32>
    %7 = tpu.matmul %0, %1, %cst {dimension_numbers = #tpu.dot_dimension_numbers<[1], [0], [0], [1], [0, 0, 1, 1], [], []>} : vector<16x128xf32>, vector<128x256xf32>, vector<16x256xf32> -> vector<16x256xf32>
    %8 = math.tanh %7 : vector<16x256xf32>
    %cst_11 = arith.constant dense<0.000000e+00> : vector<16x128xf32>
    %9 = tpu.matmul %8, %3, %cst_11 {dimension_numbers = #tpu.dot_dimension_numbers<[1], [0], [0], [1], [0, 0, 1, 1], [], []>} : vector<16x256xf32>, vector<256x128xf32>, vector<16x128xf32> -> vector<16x128xf32>
    %10 = vector.broadcast %5 : vector<1x128xf32> to vector<16x128xf32>
    %11 = arith.addf %9, %10 : vector<16x128xf32>
    %12 = arith.negf %11 : vector<16x128xf32>
    %13 = math.exp %12 : vector<16x128xf32>
    %cst_12 = arith.constant 1.000000e+00 : f32
    %14 = vector.broadcast %cst_12 : f32 to vector<16x128xf32>
    %15 = arith.addf %14, %13 : vector<16x128xf32>
    %16 = arith.divf %14, %15 : vector<16x128xf32>
    %17 = tpu.iota {dimensions = array<i32: 1>} : vector<16x128xi32>
    %c64_i32 = arith.constant 64 : i32
    %18 = vector.broadcast %c64_i32 : i32 to vector<16x128xi32>
    %19 = arith.cmpi slt, %17, %18 : vector<16x128xi32>
    %cst_13 = arith.constant 1.000000e+00 : f32
    %20 = vector.broadcast %cst_13 : f32 to vector<16x128xf32>
    %21 = arith.select %19, %16, %20 : vector<16x128xi1>, vector<16x128xf32>
    %22 = vector.extract_strided_slice %16 {offsets = [0, 64], sizes = [16, 32], strides = [1, 1]} : vector<16x128xf32> to vector<16x32xf32>
    %23 = arith.mulf %0, %21 : vector<16x128xf32>
    %cst_14 = arith.constant dense<0.000000e+00> : vector<16x128xf32>
    %24 = tpu.matmul %23, %2, %cst_14 {dimension_numbers = #tpu.dot_dimension_numbers<[1], [0], [0], [1], [0, 0, 1, 1], [], []>} : vector<16x128xf32>, vector<128x128xf32>, vector<16x128xf32> -> vector<16x128xf32>
    %25 = math.tanh %24 : vector<16x128xf32>
    %cst_15 = arith.constant dense<0.000000e+00> : vector<16x64xf32>
    %26 = tpu.matmul %25, %4, %cst_15 {dimension_numbers = #tpu.dot_dimension_numbers<[1], [0], [0], [1], [0, 0, 1, 1], [], []>} : vector<16x128xf32>, vector<128x64xf32>, vector<16x64xf32> -> vector<16x64xf32>
    %27 = vector.broadcast %6 : vector<1x64xf32> to vector<16x64xf32>
    %28 = arith.addf %26, %27 : vector<16x64xf32>
    %29 = vector.extract_strided_slice %28 {offsets = [0, 0], sizes = [16, 32], strides = [1, 1]} : vector<16x64xf32> to vector<16x32xf32>
    %30 = vector.extract_strided_slice %28 {offsets = [0, 32], sizes = [16, 32], strides = [1, 1]} : vector<16x64xf32> to vector<16x32xf32>
    %31 = math.absf %30 : vector<16x32xf32>
    %32 = vector.extract_strided_slice %0 {offsets = [0, 0], sizes = [16, 32], strides = [1, 1]} : vector<16x128xf32> to vector<16x32xf32>
    %33 = vector.extract_strided_slice %0 {offsets = [0, 32], sizes = [16, 32], strides = [1, 1]} : vector<16x128xf32> to vector<16x32xf32>
    %34 = vector.extract_strided_slice %0 {offsets = [0, 80], sizes = [16, 1], strides = [1, 1]} : vector<16x128xf32> to vector<16x1xf32>
    %cst_16 = arith.constant 1.000000e+00 : f32
    %35 = vector.broadcast %cst_16 : f32 to vector<16x32xf32>
    %36 = arith.subf %35, %22 : vector<16x32xf32>
    %37 = arith.mulf %36, %29 : vector<16x32xf32>
    %38 = arith.mulf %22, %32 : vector<16x32xf32>
    %39 = arith.addf %37, %38 : vector<16x32xf32>
    %40 = arith.mulf %36, %31 : vector<16x32xf32>
    %41 = arith.mulf %22, %33 : vector<16x32xf32>
    %42 = arith.addf %40, %41 : vector<16x32xf32>
    %cst_17 = arith.constant 1.000000e+00 : f32
    %43 = vector.broadcast %cst_17 : f32 to vector<16x1xf32>
    %44 = arith.subf %43, %34 : vector<16x1xf32>
    %45 = vector.broadcast %34 : vector<16x1xf32> to vector<16x32xf32>
    %46 = arith.mulf %45, %39 : vector<16x32xf32>
    %47 = vector.broadcast %44 : vector<16x1xf32> to vector<16x32xf32>
    %48 = arith.mulf %47, %32 : vector<16x32xf32>
    %49 = arith.addf %46, %48 : vector<16x32xf32>
    %50 = vector.broadcast %34 : vector<16x1xf32> to vector<16x32xf32>
    %51 = arith.mulf %50, %42 : vector<16x32xf32>
    %52 = vector.broadcast %44 : vector<16x1xf32> to vector<16x32xf32>
    %53 = arith.mulf %52, %33 : vector<16x32xf32>
    %54 = arith.addf %51, %53 : vector<16x32xf32>
    %55 = math.absf %54 : vector<16x32xf32>
    %cst_18 = arith.constant 0.000000e+00 : f32
    %56 = vector.broadcast %cst_18 : f32 to vector<16x32xf32>
    %57 = tpu.concatenate %39, %49, %55, %56 in 1 : vector<16x32xf32>, vector<16x32xf32>, vector<16x32xf32>, vector<16x32xf32> -> vector<16x128xf32>
    %c0_19 = arith.constant 0 : index
    %c0_20 = arith.constant 0 : index
    %58 = vector.load %arg6[%c0_19, %c0_20] : memref<16x128xf32, #tpu.memory_space<vmem>>, vector<16x128xf32>
    tpu.vector_store %arg6[%c0_19, %c0_20], %57 {strides = array<i32>} : memref<16x128xf32, #tpu.memory_space<vmem>>, vector<16x128xf32>,
    return
  }
  func.func @transform_0(%arg0: i32) -> (i32, i32) {
    %c0_i32 = arith.constant 0 : i32
    %c0_i32_0 = arith.constant 0 : i32
    return %arg0, %c0_i32 : i32, i32
  }
  func.func @transform_1(%arg0: i32) -> (i32, i32) {
    %c0_i32 = arith.constant 0 : i32
    %c0_i32_0 = arith.constant 0 : i32
    %c0_i32_1 = arith.constant 0 : i32
    return %c0_i32, %c0_i32_0 : i32, i32
  }
  func.func @transform_2(%arg0: i32) -> (i32, i32) {
    %c0_i32 = arith.constant 0 : i32
    %c0_i32_0 = arith.constant 0 : i32
    %c0_i32_1 = arith.constant 0 : i32
    return %c0_i32, %c0_i32_0 : i32, i32
  }
  func.func @transform_3(%arg0: i32) -> (i32, i32) {
    %c0_i32 = arith.constant 0 : i32
    %c0_i32_0 = arith.constant 0 : i32
    %c0_i32_1 = arith.constant 0 : i32
    return %c0_i32, %c0_i32_0 : i32, i32
  }
  func.func @transform_4(%arg0: i32) -> (i32, i32) {
    %c0_i32 = arith.constant 0 : i32
    %c0_i32_0 = arith.constant 0 : i32
    %c0_i32_1 = arith.constant 0 : i32
    return %c0_i32, %c0_i32_0 : i32, i32
  }
  func.func @transform_5(%arg0: i32) -> (i32, i32) {
    %c0_i32 = arith.constant 0 : i32
    %c0_i32_0 = arith.constant 0 : i32
    return %arg0, %c0_i32 : i32, i32
  }
}

</mosaic_0001>

<llo_original>
// kernel: tpu_custom_call.1
$region0: #{tpu_custom_call.1}
  #allocation0 [shape = 'u32[]', space=smem, size = 0x4, offset = 0x4, fixed_abs, tag = 'smem constant byte address 0x4 - core index']
  #allocation1 [shape = 'u32[144,128]{1,0:T(1,128)}', space=vmem, size = 0x12000, scoped, tag = 'internal scratch']
  %s0 = inlined_call_operand.vmem [shape: f32[16,128], index: 0, kind: input, shape index: {}]
  %s1 = inlined_call_operand.hbm [shape: f32[128,384], index: 1, kind: input, shape index: {}]
  %s2 = inlined_call_operand.hbm [shape: f32[256,128], index: 2, kind: input, shape index: {}]
  %s3 = inlined_call_operand.vmem [shape: f32[128,64], index: 3, kind: input, shape index: {}]
  %s4 = inlined_call_operand.vmem [shape: f32[1,192], index: 4, kind: input, shape index: {}]
  %s5 = inlined_call_operand.hbm [shape: f32[16,128], index: 5, kind: output, shape index: {}]
  %s6 = sld [smem:[#allocation0]]
  $region38: #{tpu_custom_call.1} parent=0
    _
  %s8 = ssub.s32 1, %s6
  %s9 = scalar_select 0, %s8, %s6
  $region1: #{tpu_custom_call.1} parent=0
    #allocation2 [shape = 'u8[196608]{0}', space=vmem, size = 0x30000, scoped, tag = 'input window, operand 1, single buffered']
    #allocation3 [shape = 's32[1]{0}', space=sflag, size = 0x4, scoped, tag = 'scoped memory for tpu_custom_call.1']
    #allocation4 [shape = 's32[1]{0}', space=sflag, size = 0x4, scoped, tag = 'scoped memory for tpu_custom_call.1']
    #allocation5 [shape = 'u8[131072]{0}', space=vmem, size = 0x20000, scoped, tag = 'input window, operand 2, single buffered']
    #allocation6 [shape = 's32[1]{0}', space=sflag, size = 0x4, scoped, tag = 'scoped memory for tpu_custom_call.1']
    #allocation7 [shape = 'u8[8192]{0}', space=vmem, size = 0x2000, scoped, tag = 'output window, operand 0, single buffered']
    %10 = vsyncpa [#allocation3], 0
    %11 = vsyncpa [#allocation6], 0
    %12 = vsyncpa [#allocation4], 0
    // Predicated region
    $region2: #{tpu_custom_call.1} parent=1 // pred_check
      _
    $region3: #{tpu_custom_call.1} parent=1 // pred_check_branch
      %14 = sbr.rel (0) target = $region5
    $region4: #{tpu_custom_call.1} parent=1 // pred_region
      _
    $region5: #{tpu_custom_call.1} parent=1 // pred_fallthru
      _
    // Predicated region
    $region6: #{tpu_custom_call.1} parent=1 // pred_check
      _
    $region7: #{tpu_custom_call.1} parent=1 // pred_check_branch
      %16 = sbr.rel (0) target = $region9
    $region8: #{tpu_custom_call.1} parent=1 // pred_region
      %s18 = ssub.s32 6144, 6144
      %19 = vsyncadd [#allocation3], %s18
      %s20 = sshll.u32 [#allocation2], 4
      %s21 = int_to_ptr.vmem [resolvable:$true] %s20
      %26 = dma.hbm_to_vmem [thread:$0]  %s1, 6144, %s21, [#allocation3], 384, 384, 24
    $region9: #{tpu_custom_call.1} parent=1 // pred_fallthru
      _
    // Predicated region
    $region10: #{tpu_custom_call.1} parent=1 // pred_check
      _
    $region11: #{tpu_custom_call.1} parent=1 // pred_check_branch
      %28 = sbr.rel (0) target = $region13
    $region12: #{tpu_custom_call.1} parent=1 // pred_region
      %s30 = ssub.s32 4096, 4096
      %31 = vsyncadd [#allocation6], %s30
      %s32 = sshll.u32 [#allocation5], 4
      %s33 = int_to_ptr.vmem [resolvable:$true] %s32
      %38 = dma.hbm_to_vmem [thread:$0]  %s2, 4096, %s33, [#allocation6], 128, 128, 8
    $region13: #{tpu_custom_call.1} parent=1 // pred_fallthru
      _
    // Predicated region
    $region14: #{tpu_custom_call.1} parent=1 // pred_check
      _
    $region15: #{tpu_custom_call.1} parent=1 // pred_check_branch
      %40 = sbr.rel (0) target = $region17
    $region16: #{tpu_custom_call.1} parent=1 // pred_region
      _
    $region17: #{tpu_custom_call.1} parent=1 // pred_fallthru
      _
    // Predicated region
    $region18: #{tpu_custom_call.1} parent=1 // pred_check
      _
    $region19: #{tpu_custom_call.1} parent=1 // pred_check_branch
      %42 = sbr.rel (0) target = $region21
    $region20: #{tpu_custom_call.1} parent=1 // pred_region
      _
    $region21: #{tpu_custom_call.1} parent=1 // pred_fallthru
      _
    // Predicated region
    $region22: #{tpu_custom_call.1} parent=1 // pred_check
      _
    $region23: #{tpu_custom_call.1} parent=1 // pred_check_branch
      %44 = sbr.rel (0) target = $region25
    $region24: #{tpu_custom_call.1} parent=1 // pred_region
      %45 = dma.done [#allocation3], 6144
    $region25: #{tpu_custom_call.1} parent=1 // pred_fallthru
      _
    // Predicated region
    $region26: #{tpu_custom_call.1} parent=1 // pred_check
      _
    $region27: #{tpu_custom_call.1} parent=1 // pred_check_branch
      %47 = sbr.rel (0) target = $region29
    $region28: #{tpu_custom_call.1} parent=1 // pred_region
      %48 = dma.done [#allocation6], 4096
    $region29: #{tpu_custom_call.1} parent=1 // pred_fallthru
      _
    %v49 = vld [vmem:[%s0] sm:$0xff]
    %v50 = vld [vmem:[%s0 + $0x8] sm:$0xff]
    %v51 = vld [vmem:[#allocation2] sm:$0xff]
    %v52 = vld [vmem:[#allocation2 + $0x8] sm:$0xff]
    %v53 = vld [vmem:[#allocation2 + $0x18] sm:$0xff]
    %v54 = vld [vmem:[#allocation2 + $0x20] sm:$0xff]
    %v55 = vld [vmem:[#allocation2 + $0x30] sm:$0xff]
    %v56 = vld [vmem:[#allocation2 + $0x38] sm:$0xff]
    %v57 = vld [vmem:[#allocation2 + $0x48] sm:$0xff]
    %v58 = vld [vmem:[#allocation2 + $0x50] sm:$0xff]
    %v59 = vld [vmem:[#allocation2 + $0x60] sm:$0xff]
    %v60 = vld [vmem:[#allocation2 + $0x68] sm:$0xff]
    %v61 = vld [vmem:[#allocation2 + $0x78] sm:$0xff]
    %v62 = vld [vmem:[#allocation2 + $0x80] sm:$0xff]
    %v63 = vld [vmem:[#allocation2 + $0x90] sm:$0xff]
    %v64 = vld [vmem:[#allocation2 + $0x98] sm:$0xff]
    %v65 = vld [vmem:[#allocation2 + $0xa8] sm:$0xff]
    %v66 = vld [vmem:[#allocation2 + $0xb0] sm:$0xff]
    %v67 = vld [vmem:[#allocation2 + $0xc0] sm:$0xff]
    %v68 = vld [vmem:[#allocation2 + $0xc8] sm:$0xff]
    %v69 = vld [vmem:[#allocation2 + $0xd8] sm:$0xff]
    %v70 = vld [vmem:[#allocation2 + $0xe0] sm:$0xff]
    %v71 = vld [vmem:[#allocation2 + $0xf0] sm:$0xff]
    %v72 = vld [vmem:[#allocation2 + $0xf8] sm:$0xff]
    %v73 = vld [vmem:[#allocation2 + $0x108] sm:$0xff]
    %v74 = vld [vmem:[#allocation2 + $0x110] sm:$0xff]
    %v75 = vld [vmem:[#allocation2 + $0x120] sm:$0xff]
    %v76 = vld [vmem:[#allocation2 + $0x128] sm:$0xff]
    %v77 = vld [vmem:[#allocation2 + $0x138] sm:$0xff]
    %v78 = vld [vmem:[#allocation2 + $0x140] sm:$0xff]
    %v79 = vld [vmem:[#allocation2 + $0x150] sm:$0xff]
    %v80 = vld [vmem:[#allocation2 + $0x158] sm:$0xff]
    %v81 = vld [vmem:[#allocation2 + $0x168] sm:$0xff]
    %v82 = vld [vmem:[#allocation2 + $0x170] sm:$0xff]
    %v83 = vld [vmem:[#allocation2 + $0x10] sm:$0xff]
    %v84 = vld [vmem:[#allocation2 + $0x28] sm:$0xff]
    %v85 = vld [vmem:[#allocation2 + $0x40] sm:$0xff]
    %v86 = vld [vmem:[#allocation2 + $0x58] sm:$0xff]
    %v87 = vld [vmem:[#allocation2 + $0x70] sm:$0xff]
    %v88 = vld [vmem:[#allocation2 + $0x88] sm:$0xff]
    %v89 = vld [vmem:[#allocation2 + $0xa0] sm:$0xff]
    %v90 = vld [vmem:[#allocation2 + $0xb8] sm:$0xff]
    %v91 = vld [vmem:[#allocation2 + $0xd0] sm:$0xff]
    %v92 = vld [vmem:[#allocation2 + $0xe8] sm:$0xff]
    %v93 = vld [vmem:[#allocation2 + $0x100] sm:$0xff]
    %v94 = vld [vmem:[#allocation2 + $0x118] sm:$0xff]
    %v95 = vld [vmem:[#allocation2 + $0x130] sm:$0xff]
    %v96 = vld [vmem:[#allocation2 + $0x148] sm:$0xff]
    %v97 = vld [vmem:[#allocation2 + $0x160] sm:$0xff]
    %v98 = vld [vmem:[#allocation2 + $0x178] sm:$0xff]
    %v99 = vld [vmem:[#allocation5] sm:$0xff]
    %v100 = vld [vmem:[#allocation5 + $0x8] sm:$0xff]
    %v101 = vld [vmem:[#allocation5 + $0x10] sm:$0xff]
    %v102 = vld [vmem:[#allocation5 + $0x18] sm:$0xff]
    %v103 = vld [vmem:[#allocation5 + $0x20] sm:$0xff]
    %v104 = vld [vmem:[#allocation5 + $0x28] sm:$0xff]
    %v105 = vld [vmem:[#allocation5 + $0x30] sm:$0xff]
    %v106 = vld [vmem:[#allocation5 + $0x38] sm:$0xff]
    %v107 = vld [vmem:[#allocation5 + $0x40] sm:$0xff]
    %v108 = vld [vmem:[#allocation5 + $0x48] sm:$0xff]
    %v109 = vld [vmem:[#allocation5 + $0x50] sm:$0xff]
    %v110 = vld [vmem:[#allocation5 + $0x58] sm:$0xff]
    %v111 = vld [vmem:[#allocation5 + $0x60] sm:$0xff]
    %v112 = vld [vmem:[#allocation5 + $0x68] sm:$0xff]
    %v113 = vld [vmem:[#allocation5 + $0x70] sm:$0xff]
    %v114 = vld [vmem:[#allocation5 + $0x78] sm:$0xff]
    %v115 = vld [vmem:[#allocation5 + $0x80] sm:$0xff]
    %v116 = vld [vmem:[#allocation5 + $0x88] sm:$0xff]
    %v117 = vld [vmem:[#allocation5 + $0x90] sm:$0xff]
    %v118 = vld [vmem:[#allocation5 + $0x98] sm:$0xff]
    %v119 = vld [vmem:[#allocation5 + $0xa0] sm:$0xff]
    %v120 = vld [vmem:[#allocation5 + $0xa8] sm:$0xff]
    %v121 = vld [vmem:[#allocation5 + $0xb0] sm:$0xff]
    %v122 = vld [vmem:[#allocation5 + $0xb8] sm:$0xff]
    %v123 = vld [vmem:[#allocation5 + $0xc0] sm:$0xff]
    %v124 = vld [vmem:[#allocation5 + $0xc8] sm:$0xff]
    %v125 = vld [vmem:[#allocation5 + $0xd0] sm:$0xff]
    %v126 = vld [vmem:[#allocation5 + $0xd8] sm:$0xff]
    %v127 = vld [vmem:[#allocation5 + $0xe0] sm:$0xff]
    %v128 = vld [vmem:[#allocation5 + $0xe8] sm:$0xff]
    %v129 = vld [vmem:[#allocation5 + $0xf0] sm:$0xff]
    %v130 = vld [vmem:[#allocation5 + $0xf8] sm:$0xff]
    %v131 = vld [vmem:[%s3] sm:$0xff]
    %v132 = vld [vmem:[%s3 + $0x8] sm:$0xff]
    %v133 = vld [vmem:[%s3 + $0x10] sm:$0xff]
    %v134 = vld [vmem:[%s3 + $0x18] sm:$0xff]
    %v135 = vld [vmem:[%s3 + $0x20] sm:$0xff]
    %v136 = vld [vmem:[%s3 + $0x28] sm:$0xff]
    %v137 = vld [vmem:[%s3 + $0x30] sm:$0xff]
    %v138 = vld [vmem:[%s3 + $0x38] sm:$0xff]
    %v139 = vld [vmem:[%s3 + $0x40] sm:$0xff]
    %v140 = vld [vmem:[%s3 + $0x48] sm:$0xff]
    %v141 = vld [vmem:[%s3 + $0x50] sm:$0xff]
    %v142 = vld [vmem:[%s3 + $0x58] sm:$0xff]
    %v143 = vld [vmem:[%s3 + $0x60] sm:$0xff]
    %v144 = vld [vmem:[%s3 + $0x68] sm:$0xff]
    %v145 = vld [vmem:[%s3 + $0x70] sm:$0xff]
    %v146 = vld [vmem:[%s3 + $0x78] sm:$0xff]
    %v147 = vld [vmem:[%s4] sm:$0x1]
    %v148 = vld [vmem:[%s4 + $0x1] sm:$0x1]
    %149 = vmatprep.subr.mxu0 %v82
    %150 = vmatpush1.msra.mxu0 %v81
    %151 = vmatprep.subr.mxu0 %v80
    %152 = vmatpush1.msra.mxu0 %v79
    %153 = vmatprep.subr.mxu0 %v78
    %154 = vmatpush1.msra.mxu0 %v77
    %155 = vmatprep.subr.mxu0 %v76
    %156 = vmatpush1.msra.mxu0 %v75
    %157 = vmatprep.subr.mxu0 %v74
    %158 = vmatpush1.msra.mxu0 %v73
    %159 = vmatprep.subr.mxu0 %v72
    %160 = vmatpush1.msra.mxu0 %v71
    %161 = vmatprep.subr.mxu0 %v70
    %162 = vmatpush1.msra.mxu0 %v69
    %163 = vmatprep.subr.mxu0 %v68
    %164 = vmatpush1.msra.mxu0 %v67
    %165 = vmatprep.subr.mxu0 %v66
    %166 = vmatpush1.msra.mxu0 %v65
    %167 = vmatprep.subr.mxu0 %v64
    %168 = vmatpush1.msra.mxu0 %v63
    %169 = vmatprep.subr.mxu0 %v62
    %170 = vmatpush1.msra.mxu0 %v61
    %171 = vmatprep.subr.mxu0 %v60
    %172 = vmatpush1.msra.mxu0 %v59
    %173 = vmatprep.subr.mxu0 %v58
    %174 = vmatpush1.msra.mxu0 %v57
    %175 = vmatprep.subr.mxu0 %v56
    %176 = vmatpush1.msra.mxu0 %v55
    %177 = vmatprep.subr.mxu0 %v54
    %178 = vmatpush1.msra.mxu0 %v53
    %179 = vmatprep.subr.mxu0 %v52
    %180 = vmatpush1.msra.mxu0 %v51
    %181 = vmatprep.subr.mxu0 0.0
    %182 = vmatpush2.msra.mxu0 0.0
    %183 = vmatprep.subr.mxu0 0.0
    %184 = vmatpush2.msra.mxu0 0.0
    %185 = vmatprep.subr.mxu0 0.0
    %186 = vmatpush2.msra.mxu0 0.0
    %187 = vmatprep.subr.mxu0 0.0
    %188 = vmatpush2.msra.mxu0 0.0
    %189 = vmatprep.subr.mxu0 0.0
    %190 = vmatpush2.msra.mxu0 0.0
    %191 = vmatprep.subr.mxu0 0.0
    %192 = vmatpush2.msra.mxu0 0.0
    %193 = vmatprep.subr.mxu0 0.0
    %194 = vmatpush2.msra.mxu0 0.0
    %195 = vmatprep.subr.mxu0 0.0
    %196 = vmatpush2.msra.mxu0 0.0
    %197 = vmatprep.subr.mxu0 0.0
    %198 = vmatpush2.msra.mxu0 0.0
    %199 = vmatprep.subr.mxu0 0.0
    %200 = vmatpush2.msra.mxu0 0.0
    %201 = vmatprep.subr.mxu0 0.0
    %202 = vmatpush2.msra.mxu0 0.0
    %203 = vmatprep.subr.mxu0 0.0
    %204 = vmatpush2.msra.mxu0 0.0
    %205 = vmatprep.subr.mxu0 0.0
    %206 = vmatpush2.msra.mxu0 0.0
    %207 = vmatprep.subr.mxu0 0.0
    %208 = vmatpush2.msra.mxu0 0.0
    %209 = vmatprep.subr.mxu0 0.0
    %210 = vmatpush2.msra.mxu0 0.0
    %211 = vmatprep.subr.mxu0 0.0
    %212 = vmatpush2.msra.mxu0 0.0
    %213 = vmatprep.mubr.f32.mxu0 0.0
    %214 = vmatmul.mubr.f32.gmra.mxu0 %v49
    %v215 = vpop.f32.mrf.mxu0
    %v216 = vadd.f32 0.0, %v215
    %v217 = vpop.f32.mrf.mxu0
    %v218 = vadd.f32 0.0, %v217
    %219 = vmatprep.mubr.f32.mxu0 0.0
    %220 = vmatmul.mubr.f32.gmra.mxu0 %v50
    %v221 = vpop.f32.mrf.mxu0
    %v222 = vadd.f32 0.0, %v221
    %v223 = vpop.f32.mrf.mxu0
    %v224 = vadd.f32 0.0, %v223
    %225 = vdwg.mxu0
    %v226 = vtanh.pop %v216
    %v227 = vtanh.pop %v218
    %v228 = vtanh.pop %v222
    %v229 = vtanh.pop %v224
    %v231 = vlaneseq
    %v232 = vshrl.u32 %v231, 7
    %v233 = vsub.s32 0, %v232
    %v234 = vrot.slane %v147, %v233
    %236 = vmatprep.subr.mxu0 0.0
    %237 = vmatpush1.msra.mxu0 %v114
    %238 = vmatprep.subr.mxu0 0.0
    %239 = vmatpush1.msra.mxu0 %v113
    %240 = vmatprep.subr.mxu0 0.0
    %241 = vmatpush1.msra.mxu0 %v112
    %242 = vmatprep.subr.mxu0 0.0
    %243 = vmatpush1.msra.mxu0 %v111
    %244 = vmatprep.subr.mxu0 0.0
    %245 = vmatpush1.msra.mxu0 %v110
    %246 = vmatprep.subr.mxu0 0.0
    %247 = vmatpush1.msra.mxu0 %v109
    %248 = vmatprep.subr.mxu0 0.0
    %249 = vmatpush1.msra.mxu0 %v108
    %250 = vmatprep.subr.mxu0 0.0
    %251 = vmatpush1.msra.mxu0 %v107
    %252 = vmatprep.subr.mxu0 0.0
    %253 = vmatpush1.msra.mxu0 %v106
    %254 = vmatprep.subr.mxu0 0.0
    %255 = vmatpush1.msra.mxu0 %v105
    %256 = vmatprep.subr.mxu0 0.0
    %257 = vmatpush1.msra.mxu0 %v104
    %258 = vmatprep.subr.mxu0 0.0
    %259 = vmatpush1.msra.mxu0 %v103
    %260 = vmatprep.subr.mxu0 0.0
    %261 = vmatpush1.msra.mxu0 %v102
    %262 = vmatprep.subr.mxu0 0.0
    %263 = vmatpush1.msra.mxu0 %v101
    %264 = vmatprep.subr.mxu0 0.0
    %265 = vmatpush1.msra.mxu0 %v100
    %266 = vmatprep.subr.mxu0 0.0
    %267 = vmatpush1.msra.mxu0 %v99
    %268 = vmatprep.subr.mxu0 0.0
    %269 = vmatpush2.msra.mxu0 %v130
    %270 = vmatprep.subr.mxu0 0.0
    %271 = vmatpush2.msra.mxu0 %v129
    %272 = vmatprep.subr.mxu0 0.0
    %273 = vmatpush2.msra.mxu0 %v128
    %274 = vmatprep.subr.mxu0 0.0
    %275 = vmatpush2.msra.mxu0 %v127
    %276 = vmatprep.subr.mxu0 0.0
    %277 = vmatpush2.msra.mxu0 %v126
    %278 = vmatprep.subr.mxu0 0.0
    %279 = vmatpush2.msra.mxu0 %v125
    %280 = vmatprep.subr.mxu0 0.0
    %281 = vmatpush2.msra.mxu0 %v124
    %282 = vmatprep.subr.mxu0 0.0
    %283 = vmatpush2.msra.mxu0 %v123
    %284 = vmatprep.subr.mxu0 0.0
    %285 = vmatpush2.msra.mxu0 %v122
    %286 = vmatprep.subr.mxu0 0.0
    %287 = vmatpush2.msra.mxu0 %v121
    %288 = vmatprep.subr.mxu0 0.0
    %289 = vmatpush2.msra.mxu0 %v120
    %290 = vmatprep.subr.mxu0 0.0
    %291 = vmatpush2.msra.mxu0 %v119
    %292 = vmatprep.subr.mxu0 0.0
    %293 = vmatpush2.msra.mxu0 %v118
    %294 = vmatprep.subr.mxu0 0.0
    %295 = vmatpush2.msra.mxu0 %v117
    %296 = vmatprep.subr.mxu0 0.0
    %297 = vmatpush2.msra.mxu0 %v116
    %298 = vmatprep.subr.mxu0 0.0
    %299 = vmatpush2.msra.mxu0 %v115
    %300 = vmatprep.mubr.f32.mxu0 %v227
    %301 = vmatmul.mubr.f32.gmra.mxu0 %v226
    %v302 = vpop.f32.mrf.mxu0
    %v303 = vadd.f32 %v234, %v302
    %v304 = vpop.f32.mrf.mxu0
    %305 = vmatprep.mubr.f32.mxu0 %v229
    %306 = vmatmul.mubr.f32.gmra.mxu0 %v228
    %v307 = vpop.f32.mrf.mxu0
    %v308 = vadd.f32 %v234, %v307
    %v309 = vpop.f32.mrf.mxu0
    %310 = vdwg.mxu0
    %v311 = vxor.u32 %v303, 2147483648
    %v312 = vxor.u32 %v308, 2147483648
    %v313 = vmul.f32 %v311, 1.442695
    %v314 = vpow.pop %v313
    %v315 = vmul.f32 %v312, 1.442695
    %v316 = vpow.pop %v315
    %v317 = vadd.f32 %v314, 1.0
    %v318 = vadd.f32 %v316, 1.0
    %v319 = vrcp.pop %v317
    %v320 = vmul.f32 1.0, %v319
    %v321 = vrcp.pop %v318
    %v322 = vmul.f32 1.0, %v321
    %v323 = vlaneseq
    %v324 = vand.u32 %v323, 127
    %vm325 = vcmp.lt.s32.totalorder %v324, 64
    %v326 = vsel %vm325, %v320, 1.0
    %v327 = vsel %vm325, %v322, 1.0
    %v328 = vmul.f32 %v49, %v326
    %v329 = vmul.f32 %v50, %v327
    %330 = vmatprep.subr.mxu0 0.0
    %331 = vmatpush1.msra.mxu0 %v98
    %332 = vmatprep.subr.mxu0 0.0
    %333 = vmatpush1.msra.mxu0 %v97
    %334 = vmatprep.subr.mxu0 0.0
    %335 = vmatpush1.msra.mxu0 %v96
    %336 = vmatprep.subr.mxu0 0.0
    %337 = vmatpush1.msra.mxu0 %v95
    %338 = vmatprep.subr.mxu0 0.0
    %339 = vmatpush1.msra.mxu0 %v94
    %340 = vmatprep.subr.mxu0 0.0
    %341 = vmatpush1.msra.mxu0 %v93
    %342 = vmatprep.subr.mxu0 0.0
    %343 = vmatpush1.msra.mxu0 %v92
    %344 = vmatprep.subr.mxu0 0.0
    %345 = vmatpush1.msra.mxu0 %v91
    %346 = vmatprep.subr.mxu0 0.0
    %347 = vmatpush1.msra.mxu0 %v90
    %348 = vmatprep.subr.mxu0 0.0
    %349 = vmatpush1.msra.mxu0 %v89
    %350 = vmatprep.subr.mxu0 0.0
    %351 = vmatpush1.msra.mxu0 %v88
    %352 = vmatprep.subr.mxu0 0.0
    %353 = vmatpush1.msra.mxu0 %v87
    %354 = vmatprep.subr.mxu0 0.0
    %355 = vmatpush1.msra.mxu0 %v86
    %356 = vmatprep.subr.mxu0 0.0
    %357 = vmatpush1.msra.mxu0 %v85
    %358 = vmatprep.subr.mxu0 0.0
    %359 = vmatpush1.msra.mxu0 %v84
    %360 = vmatprep.subr.mxu0 0.0
    %361 = vmatpush1.msra.mxu0 %v83
    %362 = vmatprep.subr.mxu0 0.0
    %363 = vmatpush2.msra.mxu0 0.0
    %364 = vmatprep.subr.mxu0 0.0
    %365 = vmatpush2.msra.mxu0 0.0
    %366 = vmatprep.subr.mxu0 0.0
    %367 = vmatpush2.msra.mxu0 0.0
    %368 = vmatprep.subr.mxu0 0.0
    %369 = vmatpush2.msra.mxu0 0.0
    %370 = vmatprep.subr.mxu0 0.0
    %371 = vmatpush2.msra.mxu0 0.0
    %372 = vmatprep.subr.mxu0 0.0
    %373 = vmatpush2.msra.mxu0 0.0
    %374 = vmatprep.subr.mxu0 0.0
    %375 = vmatpush2.msra.mxu0 0.0
    %376 = vmatprep.subr.mxu0 0.0
    %377 = vmatpush2.msra.mxu0 0.0
    %378 = vmatprep.subr.mxu0 0.0
    %379 = vmatpush2.msra.mxu0 0.0
    %380 = vmatprep.subr.mxu0 0.0
    %381 = vmatpush2.msra.mxu0 0.0
    %382 = vmatprep.subr.mxu0 0.0
    %383 = vmatpush2.msra.mxu0 0.0
    %384 = vmatprep.subr.mxu0 0.0
    %385 = vmatpush2.msra.mxu0 0.0
    %386 = vmatprep.subr.mxu0 0.0
    %387 = vmatpush2.msra.mxu0 0.0
    %388 = vmatprep.subr.mxu0 0.0
    %389 = vmatpush2.msra.mxu0 0.0
    %390 = vmatprep.subr.mxu0 0.0
    %391 = vmatpush2.msra.mxu0 0.0
    %392 = vmatprep.subr.mxu0 0.0
    %393 = vmatpush2.msra.mxu0 0.0
    %394 = vmatprep.mubr.f32.mxu0 0.0
    %395 = vmatmul.mubr.f32.gmra.mxu0 %v328
    %v396 = vpop.f32.mrf.mxu0
    %v397 = vadd.f32 0.0, %v396
    %v398 = vpop.f32.mrf.mxu0
    %399 = vmatprep.mubr.f32.mxu0 0.0
    %400 = vmatmul.mubr.f32.gmra.mxu0 %v329
    %v401 = vpop.f32.mrf.mxu0
    %v402 = vadd.f32 0.0, %v401
    %v403 = vpop.f32.mrf.mxu0
    %404 = vdwg.mxu0
    %v405 = vtanh.pop %v397
    %v406 = vtanh.pop %v402
    %v408 = vlaneseq
    %v409 = vshrl.u32 %v408, 7
    %v410 = vsub.s32 0, %v409
    %v411 = vrot.slane %v148, %v410
    %413 = vmatprep.subr.mxu0 0.0
    %414 = vmatpush1.msra.mxu0 %v146
    %415 = vmatprep.subr.mxu0 0.0
    %416 = vmatpush1.msra.mxu0 %v145
    %417 = vmatprep.subr.mxu0 0.0
    %418 = vmatpush1.msra.mxu0 %v144
    %419 = vmatprep.subr.mxu0 0.0
    %420 = vmatpush1.msra.mxu0 %v143
    %421 = vmatprep.subr.mxu0 0.0
    %422 = vmatpush1.msra.mxu0 %v142
    %423 = vmatprep.subr.mxu0 0.0
    %424 = vmatpush1.msra.mxu0 %v141
    %425 = vmatprep.subr.mxu0 0.0
    %426 = vmatpush1.msra.mxu0 %v140
    %427 = vmatprep.subr.mxu0 0.0
    %428 = vmatpush1.msra.mxu0 %v139
    %429 = vmatprep.subr.mxu0 0.0
    %430 = vmatpush1.msra.mxu0 %v138
    %431 = vmatprep.subr.mxu0 0.0
    %432 = vmatpush1.msra.mxu0 %v137
    %433 = vmatprep.subr.mxu0 0.0
    %434 = vmatpush1.msra.mxu0 %v136
    %435 = vmatprep.subr.mxu0 0.0
    %436 = vmatpush1.msra.mxu0 %v135
    %437 = vmatprep.subr.mxu0 0.0
    %438 = vmatpush1.msra.mxu0 %v134
    %439 = vmatprep.subr.mxu0 0.0
    %440 = vmatpush1.msra.mxu0 %v133
    %441 = vmatprep.subr.mxu0 0.0
    %442 = vmatpush1.msra.mxu0 %v132
    %443 = vmatprep.subr.mxu0 0.0
    %444 = vmatpush1.msra.mxu0 %v131
    %445 = vmatprep.subr.mxu0 0.0
    %446 = vmatpush2.msra.mxu0 0.0
    %447 = vmatprep.subr.mxu0 0.0
    %448 = vmatpush2.msra.mxu0 0.0
    %449 = vmatprep.subr.mxu0 0.0
    %450 = vmatpush2.msra.mxu0 0.0
    %451 = vmatprep.subr.mxu0 0.0
    %452 = vmatpush2.msra.mxu0 0.0
    %453 = vmatprep.subr.mxu0 0.0
    %454 = vmatpush2.msra.mxu0 0.0
    %455 = vmatprep.subr.mxu0 0.0
    %456 = vmatpush2.msra.mxu0 0.0
    %457 = vmatprep.subr.mxu0 0.0
    %458 = vmatpush2.msra.mxu0 0.0
    %459 = vmatprep.subr.mxu0 0.0
    %460 = vmatpush2.msra.mxu0 0.0
    %461 = vmatprep.subr.mxu0 0.0
    %462 = vmatpush2.msra.mxu0 0.0
    %463 = vmatprep.subr.mxu0 0.0
    %464 = vmatpush2.msra.mxu0 0.0
    %465 = vmatprep.subr.mxu0 0.0
    %466 = vmatpush2.msra.mxu0 0.0
    %467 = vmatprep.subr.mxu0 0.0
    %468 = vmatpush2.msra.mxu0 0.0
    %469 = vmatprep.subr.mxu0 0.0
    %470 = vmatpush2.msra.mxu0 0.0
    %471 = vmatprep.subr.mxu0 0.0
    %472 = vmatpush2.msra.mxu0 0.0
    %473 = vmatprep.subr.mxu0 0.0
    %474 = vmatpush2.msra.mxu0 0.0
    %475 = vmatprep.subr.mxu0 0.0
    %476 = vmatpush2.msra.mxu0 0.0
    %477 = vmatprep.mubr.f32.mxu0 0.0
    %478 = vmatmul.mubr.f32.gmra.mxu0 %v405
    %v479 = vpop.f32.mrf.mxu0
    %v480 = vadd.f32 %v411, %v479
    %v481 = vpop.f32.mrf.mxu0
    %482 = vmatprep.mubr.f32.mxu0 0.0
    %483 = vmatmul.mubr.f32.gmra.mxu0 %v406
    %v484 = vpop.f32.mrf.mxu0
    %v485 = vadd.f32 %v411, %v484
    %v486 = vpop.f32.mrf.mxu0
    %487 = vdwg.mxu0
    %v488 = vand.u32 2147483647, %v480
    %v489 = vand.u32 2147483647, %v485
    %v490 = vsub.f32 1.0, %v320
    %v491 = vsub.f32 1.0, %v322
    %494 = vrot.lane.b32.xlu0 %v480, 64
    %v495 = vpop.permute.xlu0 %494
    %496 = vrot.lane.b32.xlu0 %v485, 64
    %v497 = vpop.permute.xlu0 %496
    %v500 = vmul.f32 %v490, %v495
    %v501 = vmul.f32 %v491, %v497
    %504 = vrot.lane.b32.xlu0 %v49, 64
    %v505 = vpop.permute.xlu0 %504
    %506 = vrot.lane.b32.xlu0 %v50, 64
    %v507 = vpop.permute.xlu0 %506
    %v510 = vmul.f32 %v320, %v505
    %v511 = vmul.f32 %v322, %v507
    %v512 = vadd.f32 %v500, %v510
    %v513 = vadd.f32 %v501, %v511
    %516 = vrot.lane.b32.xlu0 %v488, 32
    %v517 = vpop.permute.xlu0 %516
    %518 = vrot.lane.b32.xlu0 %v489, 32
    %v519 = vpop.permute.xlu0 %518
    %v522 = vmul.f32 %v490, %v517
    %v523 = vmul.f32 %v491, %v519
    %524 = vrot.lane.b32.xlu0 %v49, 32
    %v525 = vpop.permute.xlu0 %524
    %526 = vrot.lane.b32.xlu0 %v50, 32
    %v527 = vpop.permute.xlu0 %526
    %v530 = vmul.f32 %v320, %v525
    %v531 = vmul.f32 %v322, %v527
    %v532 = vadd.f32 %v522, %v530
    %v533 = vadd.f32 %v523, %v531
    %v534 = vsub.f32 1.0, %v49
    %v535 = vsub.f32 1.0, %v50
    %536 = vset.pattern.permute.xlu0 80
    %537 = vperm.xlu0 %536, %v49
    %v538 = vpop.permute.xlu0 %537
    %540 = vset.pattern.permute.xlu0 80
    %541 = vperm.xlu0 %540, %v50
    %v542 = vpop.permute.xlu0 %541
    %v544 = vmul.f32 %v538, %v512
    %v545 = vmul.f32 %v542, %v513
    %547 = vset.pattern.permute.xlu0 80
    %548 = vperm.xlu0 %547, %v534
    %v549 = vpop.permute.xlu0 %548
    %552 = vset.pattern.permute.xlu0 80
    %553 = vperm.xlu0 %552, %v535
    %v554 = vpop.permute.xlu0 %553
    %v556 = vmul.f32 %v549, %v49
    %v557 = vmul.f32 %v554, %v50
    %560 = vrot.lane.b32.xlu0 %v556, 64
    %v561 = vpop.permute.xlu0 %560
    %562 = vrot.lane.b32.xlu0 %v557, 64
    %v563 = vpop.permute.xlu0 %562
    %v566 = vadd.f32 %v544, %v561
    %v567 = vadd.f32 %v545, %v563
    %v568 = vmul.f32 %v538, %v532
    %v569 = vmul.f32 %v542, %v533
    %570 = vrot.lane.b32.xlu0 %v556, 32
    %v571 = vpop.permute.xlu0 %570
    %572 = vrot.lane.b32.xlu0 %v557, 32
    %v573 = vpop.permute.xlu0 %572
    %v576 = vadd.f32 %v568, %v571
    %v577 = vadd.f32 %v569, %v573
    %v578 = vand.u32 2147483647, %v576
    %v579 = vand.u32 2147483647, %v577
    %582 = vrot.lane.b32.xlu0 %v512, 64
    %v583 = vpop.permute.xlu0 %582
    %584 = vrot.lane.b32.xlu0 %v513, 64
    %v585 = vpop.permute.xlu0 %584
    %590 = vrot.lane.b32.xlu0 %v566, 96
    %v591 = vpop.permute.xlu0 %590
    %592 = vrot.lane.b32.xlu0 %v567, 96
    %v593 = vpop.permute.xlu0 %592
    %vm596 = vcmask 261120
    %v597 = vsel %vm596, %v583, %v591
    %v598 = vsel %vm596, %v585, %v593
    %vm599 = vcmask 523264
    %v600 = vsel %vm599, %v597, %v578
    %v601 = vsel %vm599, %v598, %v579
    %vm602 = vcmask 785408
    %v603 = vsel %vm602, %v600, 0.0
    %v604 = vsel %vm602, %v601, 0.0
    %605 = vst [vmem:[#allocation7] sm:$0xff] %v603
    %606 = vst [vmem:[#allocation7 + $0x8] sm:$0xff] %v604
    // Predicated region
    $region30: #{tpu_custom_call.1} parent=1 // pred_check
      _
    $region31: #{tpu_custom_call.1} parent=1 // pred_check_branch
      %608 = sbr.rel (0) target = $region33
    $region32: #{tpu_custom_call.1} parent=1 // pred_region
      %s610 = ssub.s32 256, 256
      %611 = vsyncadd [#allocation4], %s610
      %s612 = sshll.u32 [#allocation7], 4
      %s613 = int_to_ptr.vmem [resolvable:$true] %s612
      %618 = dma.vmem_to_hbm [thread:$0]  %s613, 256, %s5, [#allocation4], 128, 128, 8
    $region33: #{tpu_custom_call.1} parent=1 // pred_fallthru
      _
    // Predicated region
    $region34: #{tpu_custom_call.1} parent=1 // pred_check
      _
    $region35: #{tpu_custom_call.1} parent=1 // pred_check_branch
      %620 = sbr.rel (0) target = $region37
    $region36: #{tpu_custom_call.1} parent=1 // pred_region
      %621 = dma.done [#allocation4], 256
    $region37: #{tpu_custom_call.1} parent=1 // pred_fallthru
      _
    %622 = vsyncpa [#allocation3], 1
    %623 = vsyncpa [#allocation6], 1
    %624 = vsyncpa [#allocation4], 1

</llo_original>
